<compile_context>
chip_gen: v5e
topology: v5e:2x2
jax: 0.10.0
libtpu: 0.0.40
codegen_flags: <defaults>
</compile_context>

<pallas_src>
import jax
import jax.numpy as jnp
from jax.experimental import pallas as pl
from jax.experimental.pallas import tpu as pltpu

HIDDEN_SIZE = 32          # small, synthetic (config.hidden_size)
OUT_FEATURES = 768        # fixed by the module
INIT_NORMAL_STD = 0.01    # stand-in for config.init_normal_std


def _reduce_hidden_kernel(xc_ref, xa_ref, xn_ref,
                          w0_ref, w1_ref, w2_ref, b_ref, o_ref):
    # Sum of three MXU matmuls into one f32 accumulator (no lane concat).
    acc = jnp.dot(xc_ref[...], w0_ref[...], preferred_element_type=jnp.float32)
    acc += jnp.dot(xa_ref[...], w1_ref[...], preferred_element_type=jnp.float32)
    acc += jnp.dot(xn_ref[...], w2_ref[...], preferred_element_type=jnp.float32)
    acc += b_ref[...]                       # (1, 768) bias broadcast, f32
    o_ref[...] = jnp.maximum(acc, 0.0).astype(o_ref.dtype)


def reduce_hidden(code_hidden, ast_hidden, name_hidden, weight, bias,
                  *, tile_m=512):
    """code/ast/name_hidden: [L, B, H]; weight: [3H, 768]; bias: [768]."""
    L, B, H = code_hidden.shape
    out_dtype = code_hidden.dtype
    M = L * B

    # Pad M to a multiple of 8 (sublane), clamp the tile, then make the padded
    # M a multiple of the tile so every grid step sees a full block.
    m_pad = max(8, ((M + 7) // 8) * 8)
    tm = min(tile_m, m_pad)
    m_pad = ((m_pad + tm - 1) // tm) * tm
    grid_m = m_pad // tm

    def flat_pad(x):
        x = x.reshape(M, H).astype(jnp.bfloat16)
        return jnp.pad(x, ((0, m_pad - M), (0, 0)))

    xc = flat_pad(code_hidden)
    xa = flat_pad(ast_hidden)
    xn = flat_pad(name_hidden)

    w = weight.astype(jnp.bfloat16)
    w0, w1, w2 = w[:H], w[H:2 * H], w[2 * H:3 * H]      # three (H, 768) blocks
    b2 = bias.astype(jnp.float32).reshape(1, OUT_FEATURES)

    out_itemsize = jnp.dtype(out_dtype).itemsize
    cost = pl.CostEstimate(
        flops=2 * m_pad * (3 * H) * OUT_FEATURES,
        transcendentals=0,
        bytes_accessed=(3 * m_pad * H * 2            # bf16 hiddens
                        + 3 * H * OUT_FEATURES * 2   # bf16 weight
                        + OUT_FEATURES * 4           # f32 bias
                        + m_pad * OUT_FEATURES * out_itemsize))

    out = pl.pallas_call(
        _reduce_hidden_kernel,
        out_shape=jax.ShapeDtypeStruct((m_pad, OUT_FEATURES), out_dtype),
        grid=(grid_m,),
        in_specs=[
            pl.BlockSpec((tm, H), lambda i: (i, 0)),
            pl.BlockSpec((tm, H), lambda i: (i, 0)),
            pl.BlockSpec((tm, H), lambda i: (i, 0)),
            pl.BlockSpec((H, OUT_FEATURES), lambda i: (0, 0)),   # resident
            pl.BlockSpec((H, OUT_FEATURES), lambda i: (0, 0)),   # resident
            pl.BlockSpec((H, OUT_FEATURES), lambda i: (0, 0)),   # resident
            pl.BlockSpec((1, OUT_FEATURES), lambda i: (0, 0)),   # resident
        ],
        out_specs=pl.BlockSpec((tm, OUT_FEATURES), lambda i: (i, 0)),
        compiler_params=pltpu.CompilerParams(
            dimension_semantics=("parallel",)),   # shards tiles across TCs on v7x
        cost_estimate=cost,
    )(xc, xa, xn, w0, w1, w2, b2)

    return out[:M].reshape(L, B, OUT_FEATURES)


if __name__ == "__main__":
    key = jax.random.PRNGKey(0)
    k_c, k_a, k_n, k_w, k_b = jax.random.split(key, 5)

    L, B, H = 1, 2, HIDDEN_SIZE  # [num_layers, batch, hidden]

    code_hidden = jax.random.normal(k_c, (L, B, H), dtype=jnp.float32)
    ast_hidden = jax.random.normal(k_a, (L, B, H), dtype=jnp.float32)
    name_hidden = jax.random.normal(k_n, (L, B, H), dtype=jnp.float32)

    # Deterministic "init_linear_wt": normal(std=INIT_NORMAL_STD) weight+bias.
    # Stored as (in_features, out_features) = (3H, 768) for the kernel matmul.
    weight = INIT_NORMAL_STD * jax.random.normal(
        k_w, (3 * H, OUT_FEATURES), dtype=jnp.float32)
    bias = INIT_NORMAL_STD * jax.random.normal(
        k_b, (OUT_FEATURES,), dtype=jnp.float32)

    out = reduce_hidden(code_hidden, ast_hidden, name_hidden, weight, bias)
    out = jax.block_until_ready(out)

    # Pure-JAX f32 reference (same semantics as the PyTorch forward).  Kernel
    # uses bf16 operands with f32 accumulation, so compare loosely.
    ref = jnp.maximum(
        jnp.concatenate([code_hidden, ast_hidden, name_hidden], axis=2)
        @ weight + bias, 0.0)
    assert out.shape == (L, B, OUT_FEATURES)
    assert jnp.allclose(out, ref, atol=5e-3, rtol=5e-2), (
        float(jnp.max(jnp.abs(out - ref))))

    print("KERNEL_OK")
</pallas_src>

<mosaic_0001>
module attributes {stable_mosaic.version = 11 : i64} {
  func.func @_reduce_hidden_kernel(%arg0: i32, %arg1: memref<8x32xbf16, #tpu.memory_space<vmem>>, %arg2: memref<8x32xbf16, #tpu.memory_space<vmem>>, %arg3: memref<8x32xbf16, #tpu.memory_space<vmem>>, %arg4: memref<32x768xbf16, #tpu.memory_space<vmem>>, %arg5: memref<32x768xbf16, #tpu.memory_space<vmem>>, %arg6: memref<32x768xbf16, #tpu.memory_space<vmem>>, %arg7: memref<1x768xf32, #tpu.memory_space<vmem>>, %arg8: memref<8x768xf32, #tpu.memory_space<vmem>>) attributes {dimension_semantics = [#tpu.dimension_semantics<parallel>], iteration_bounds = array<i64: 1>, scalar_prefetch = 0 : i64, scratch_operands = 0 : i64, tpu.core_type = #tpu.core_type<tc>, window_params = [{transform_indices = @transform_0, window_bounds = array<i64: 8, 32>}, {transform_indices = @transform_1, window_bounds = array<i64: 8, 32>}, {transform_indices = @transform_2, window_bounds = array<i64: 8, 32>}, {pipeline_mode = #tpu.pipeline_mode<synchronous>, transform_indices = @transform_3, window_bounds = array<i64: 32, 768>}, {pipeline_mode = #tpu.pipeline_mode<synchronous>, transform_indices = @transform_4, window_bounds = array<i64: 32, 768>}, {pipeline_mode = #tpu.pipeline_mode<synchronous>, transform_indices = @transform_5, window_bounds = array<i64: 32, 768>}, {pipeline_mode = #tpu.pipeline_mode<synchronous>, transform_indices = @transform_6, window_bounds = array<i64: 1, 768>}, {transform_indices = @transform_7, window_bounds = array<i64: 8, 768>}]} {
    %c0 = arith.constant 0 : index
    %c0_0 = arith.constant 0 : index
    %0 = vector.load %arg1[%c0, %c0_0] : memref<8x32xbf16, #tpu.memory_space<vmem>>, vector<8x32xbf16>
    %c0_1 = arith.constant 0 : index
    %c0_2 = arith.constant 0 : index
    %1 = vector.load %arg4[%c0_1, %c0_2] : memref<32x768xbf16, #tpu.memory_space<vmem>>, vector<32x768xbf16>
    %cst = arith.constant dense<0.000000e+00> : vector<8x768xf32>
    %2 = tpu.matmul %0, %1, %cst {dimension_numbers = #tpu.dot_dimension_numbers<[1], [0], [0], [1], [0, 0, 1, 1], [], []>} : vector<8x32xbf16>, vector<32x768xbf16>, vector<8x768xf32> -> vector<8x768xf32>
    %c0_3 = arith.constant 0 : index
    %c0_4 = arith.constant 0 : index
    %3 = vector.load %arg2[%c0_3, %c0_4] : memref<8x32xbf16, #tpu.memory_space<vmem>>, vector<8x32xbf16>
    %c0_5 = arith.constant 0 : index
    %c0_6 = arith.constant 0 : index
    %4 = vector.load %arg5[%c0_5, %c0_6] : memref<32x768xbf16, #tpu.memory_space<vmem>>, vector<32x768xbf16>
    %cst_7 = arith.constant dense<0.000000e+00> : vector<8x768xf32>
    %5 = tpu.matmul %3, %4, %cst_7 {dimension_numbers = #tpu.dot_dimension_numbers<[1], [0], [0], [1], [0, 0, 1, 1], [], []>} : vector<8x32xbf16>, vector<32x768xbf16>, vector<8x768xf32> -> vector<8x768xf32>
    %6 = arith.addf %2, %5 : vector<8x768xf32>
    %c0_8 = arith.constant 0 : index
    %c0_9 = arith.constant 0 : index
    %7 = vector.load %arg3[%c0_8, %c0_9] : memref<8x32xbf16, #tpu.memory_space<vmem>>, vector<8x32xbf16>
    %c0_10 = arith.constant 0 : index
    %c0_11 = arith.constant 0 : index
    %8 = vector.load %arg6[%c0_10, %c0_11] : memref<32x768xbf16, #tpu.memory_space<vmem>>, vector<32x768xbf16>
    %cst_12 = arith.constant dense<0.000000e+00> : vector<8x768xf32>
    %9 = tpu.matmul %7, %8, %cst_12 {dimension_numbers = #tpu.dot_dimension_numbers<[1], [0], [0], [1], [0, 0, 1, 1], [], []>} : vector<8x32xbf16>, vector<32x768xbf16>, vector<8x768xf32> -> vector<8x768xf32>
    %10 = arith.addf %6, %9 : vector<8x768xf32>
    %c0_13 = arith.constant 0 : index
    %c0_14 = arith.constant 0 : index
    %11 = vector.load %arg7[%c0_13, %c0_14] : memref<1x768xf32, #tpu.memory_space<vmem>>, vector<1x768xf32>
    %12 = vector.broadcast %11 : vector<1x768xf32> to vector<8x768xf32>
    %13 = arith.addf %10, %12 : vector<8x768xf32>
    %cst_15 = arith.constant 0.000000e+00 : f32
    %14 = vector.broadcast %cst_15 : f32 to vector<8x768xf32>
    %15 = arith.maximumf %13, %14 : vector<8x768xf32>
    %c0_16 = arith.constant 0 : index
    %c0_17 = arith.constant 0 : index
    %16 = vector.load %arg8[%c0_16, %c0_17] : memref<8x768xf32, #tpu.memory_space<vmem>>, vector<8x768xf32>
    tpu.vector_store %arg8[%c0_16, %c0_17], %15 {strides = array<i32>} : memref<8x768xf32, #tpu.memory_space<vmem>>, vector<8x768xf32>,
    return
  }
  func.func @transform_0(%arg0: i32) -> (i32, i32) {
    %c0_i32 = arith.constant 0 : i32
    %c0_i32_0 = arith.constant 0 : i32
    return %arg0, %c0_i32 : i32, i32
  }
  func.func @transform_1(%arg0: i32) -> (i32, i32) {
    %c0_i32 = arith.constant 0 : i32
    %c0_i32_0 = arith.constant 0 : i32
    return %arg0, %c0_i32 : i32, i32
  }
  func.func @transform_2(%arg0: i32) -> (i32, i32) {
    %c0_i32 = arith.constant 0 : i32
    %c0_i32_0 = arith.constant 0 : i32
    return %arg0, %c0_i32 : i32, i32
  }
  func.func @transform_3(%arg0: i32) -> (i32, i32) {
    %c0_i32 = arith.constant 0 : i32
    %c0_i32_0 = arith.constant 0 : i32
    %c0_i32_1 = arith.constant 0 : i32
    return %c0_i32, %c0_i32_0 : i32, i32
  }
  func.func @transform_4(%arg0: i32) -> (i32, i32) {
    %c0_i32 = arith.constant 0 : i32
    %c0_i32_0 = arith.constant 0 : i32
    %c0_i32_1 = arith.constant 0 : i32
    return %c0_i32, %c0_i32_0 : i32, i32
  }
  func.func @transform_5(%arg0: i32) -> (i32, i32) {
    %c0_i32 = arith.constant 0 : i32
    %c0_i32_0 = arith.constant 0 : i32
    %c0_i32_1 = arith.constant 0 : i32
    return %c0_i32, %c0_i32_0 : i32, i32
  }
  func.func @transform_6(%arg0: i32) -> (i32, i32) {
    %c0_i32 = arith.constant 0 : i32
    %c0_i32_0 = arith.constant 0 : i32
    %c0_i32_1 = arith.constant 0 : i32
    return %c0_i32, %c0_i32_0 : i32, i32
  }
  func.func @transform_7(%arg0: i32) -> (i32, i32) {
    %c0_i32 = arith.constant 0 : i32
    %c0_i32_0 = arith.constant 0 : i32
    return %arg0, %c0_i32 : i32, i32
  }
}

</mosaic_0001>

<llo_original>
// kernel: tpu_custom_call.1
$region0: #{tpu_custom_call.1}
  #allocation0 [shape = 'u32[]', space=smem, size = 0x4, offset = 0x4, fixed_abs, tag = 'smem constant byte address 0x4 - core index']
  #allocation1 [shape = 'u32[72,128]{1,0:T(1,128)}', space=vmem, size = 0x9000, scoped, tag = 'internal scratch']
  %s0 = inlined_call_operand.hbm [shape: bf16[8,32], index: 0, kind: input, shape index: {}]
  %s1 = inlined_call_operand.hbm [shape: bf16[8,32], index: 1, kind: input, shape index: {}]
  %s2 = inlined_call_operand.hbm [shape: bf16[8,32], index: 2, kind: input, shape index: {}]
  %s3 = inlined_call_operand.hbm [shape: bf16[32,768], index: 3, kind: input, shape index: {}]
  %s4 = inlined_call_operand.hbm [shape: bf16[32,768], index: 4, kind: input, shape index: {}]
  %s5 = inlined_call_operand.hbm [shape: bf16[32,768], index: 5, kind: input, shape index: {}]
  %s6 = inlined_call_operand.hbm [shape: f32[1,768], index: 6, kind: input, shape index: {}]
  %s7 = inlined_call_operand.hbm [shape: f32[8,768], index: 7, kind: output, shape index: {}]
  %s8 = sld [smem:[#allocation0]]
  $region66: #{tpu_custom_call.1} parent=0
    _
  %s10 = ssub.s32 1, %s8
  %s11 = scalar_select 0, %s10, %s8
  $region1: #{tpu_custom_call.1} parent=0
    #allocation2 [shape = 'u8[2048]{0}', space=vmem, size = 0x800, scoped, tag = 'input window, operand 0, single buffered']
    #allocation3 [shape = 's32[1]{0}', space=sflag, size = 0x4, scoped, tag = 'scoped memory for tpu_custom_call.1']
    #allocation4 [shape = 's32[1]{0}', space=sflag, size = 0x4, scoped, tag = 'scoped memory for tpu_custom_call.1']
    #allocation5 [shape = 'u8[2048]{0}', space=vmem, size = 0x800, scoped, tag = 'input window, operand 1, single buffered']
    #allocation6 [shape = 's32[1]{0}', space=sflag, size = 0x4, scoped, tag = 'scoped memory for tpu_custom_call.1']
    #allocation7 [shape = 'u8[2048]{0}', space=vmem, size = 0x800, scoped, tag = 'input window, operand 2, single buffered']
    #allocation8 [shape = 'u8[49152]{0}', space=vmem, size = 0xc000, scoped, tag = 'input window, operand 3, single buffered']
    #allocation9 [shape = 's32[1]{0}', space=sflag, size = 0x4, scoped, tag = 'scoped memory for tpu_custom_call.1']
    #allocation10 [shape = 'u8[49152]{0}', space=vmem, size = 0xc000, scoped, tag = 'input window, operand 4, single buffered']
    #allocation11 [shape = 'u8[49152]{0}', space=vmem, size = 0xc000, scoped, tag = 'input window, operand 5, single buffered']
    #allocation12 [shape = 's32[1]{0}', space=sflag, size = 0x4, scoped, tag = 'scoped memory for tpu_custom_call.1']
    #allocation13 [shape = 'u8[3072]{0}', space=vmem, size = 0xc00, scoped, tag = 'input window, operand 6, single buffered']
    #allocation14 [shape = 'u8[24576]{0}', space=vmem, size = 0x6000, scoped, tag = 'output window, operand 0, single buffered']
    %12 = vsyncpa [#allocation3], 0
    %13 = vsyncpa [#allocation6], 0
    %14 = vsyncpa [#allocation9], 0
    %15 = vsyncpa [#allocation12], 0
    %16 = vsyncpa [#allocation4], 0
    // Predicated region
    $region2: #{tpu_custom_call.1} parent=1 // pred_check
      _
    $region3: #{tpu_custom_call.1} parent=1 // pred_check_branch
      %18 = sbr.rel (0) target = $region5
    $region4: #{tpu_custom_call.1} parent=1 // pred_region
      %20 = vsyncadd [#allocation3], 0
      %s22 = sshll.u32 %s0, 4
      %s23 = int_to_ptr.hbm [resolvable:$true] %s22
      %s24 = sshll.u32 [#allocation2], 4
      %s25 = int_to_ptr.vmem [resolvable:$true] %s24
      %27 = dma.hbm_to_vmem [thread:$0]  %s23, 64, %s25, [#allocation3]
    $region5: #{tpu_custom_call.1} parent=1 // pred_fallthru
      _
    // Predicated region
    $region6: #{tpu_custom_call.1} parent=1 // pred_check
      _
    $region7: #{tpu_custom_call.1} parent=1 // pred_check_branch
      %29 = sbr.rel (0) target = $region9
    $region8: #{tpu_custom_call.1} parent=1 // pred_region
      %31 = vsyncadd [#allocation6], 0
      %s33 = sshll.u32 %s1, 4
      %s34 = int_to_ptr.hbm [resolvable:$true] %s33
      %s35 = sshll.u32 [#allocation5], 4
      %s36 = int_to_ptr.vmem [resolvable:$true] %s35
      %38 = dma.hbm_to_vmem [thread:$0]  %s34, 64, %s36, [#allocation6]
    $region9: #{tpu_custom_call.1} parent=1 // pred_fallthru
      _
    // Predicated region
    $region10: #{tpu_custom_call.1} parent=1 // pred_check
      _
    $region11: #{tpu_custom_call.1} parent=1 // pred_check_branch
      %40 = sbr.rel (0) target = $region13
    $region12: #{tpu_custom_call.1} parent=1 // pred_region
      %42 = vsyncadd [#allocation6], 0
      %s44 = sshll.u32 %s2, 4
      %s45 = int_to_ptr.hbm [resolvable:$true] %s44
      %s46 = sshll.u32 [#allocation7], 4
      %s47 = int_to_ptr.vmem [resolvable:$true] %s46
      %49 = dma.hbm_to_vmem [thread:$0]  %s45, 64, %s47, [#allocation6]
    $region13: #{tpu_custom_call.1} parent=1 // pred_fallthru
      _
    // Predicated region
    $region14: #{tpu_custom_call.1} parent=1 // pred_check
      _
    $region15: #{tpu_custom_call.1} parent=1 // pred_check_branch
      %51 = sbr.rel (0) target = $region17
    $region16: #{tpu_custom_call.1} parent=1 // pred_region
      %53 = vsyncadd [#allocation9], 0
      %s54 = sshll.u32 %s3, 4
      %s55 = int_to_ptr.hbm [resolvable:$true] %s54
      %s56 = sshll.u32 [#allocation8], 4
      %s57 = int_to_ptr.vmem [resolvable:$true] %s56
      %62 = dma.hbm_to_vmem [thread:$0]  %s55, 1536, %s57, [#allocation9], 384, 384, 24
    $region17: #{tpu_custom_call.1} parent=1 // pred_fallthru
      _
    // Predicated region
    $region18: #{tpu_custom_call.1} parent=1 // pred_check
      _
    $region19: #{tpu_custom_call.1} parent=1 // pred_check_branch
      %64 = sbr.rel (0) target = $region21
    $region20: #{tpu_custom_call.1} parent=1 // pred_region
      %66 = vsyncadd [#allocation9], 0
      %s67 = sshll.u32 %s4, 4
      %s68 = int_to_ptr.hbm [resolvable:$true] %s67
      %s69 = sshll.u32 [#allocation10], 4
      %s70 = int_to_ptr.vmem [resolvable:$true] %s69
      %75 = dma.hbm_to_vmem [thread:$0]  %s68, 1536, %s70, [#allocation9], 384, 384, 24
    $region21: #{tpu_custom_call.1} parent=1 // pred_fallthru
      _
    // Predicated region
    $region22: #{tpu_custom_call.1} parent=1 // pred_check
      _
    $region23: #{tpu_custom_call.1} parent=1 // pred_check_branch
      %77 = sbr.rel (0) target = $region25
    $region24: #{tpu_custom_call.1} parent=1 // pred_region
      %79 = vsyncadd [#allocation12], 0
      %s80 = sshll.u32 %s5, 4
      %s81 = int_to_ptr.hbm [resolvable:$true] %s80
      %s82 = sshll.u32 [#allocation11], 4
      %s83 = int_to_ptr.vmem [resolvable:$true] %s82
      %88 = dma.hbm_to_vmem [thread:$0]  %s81, 1536, %s83, [#allocation12], 384, 384, 24
    $region25: #{tpu_custom_call.1} parent=1 // pred_fallthru
      _
    // Predicated region
    $region26: #{tpu_custom_call.1} parent=1 // pred_check
      _
    $region27: #{tpu_custom_call.1} parent=1 // pred_check_branch
      %90 = sbr.rel (0) target = $region29
    $region28: #{tpu_custom_call.1} parent=1 // pred_region
      %92 = vsyncadd [#allocation12], 0
      %s94 = sshll.u32 %s6, 4
      %s95 = int_to_ptr.hbm [resolvable:$true] %s94
      %s96 = sshll.u32 [#allocation13], 4
      %s97 = int_to_ptr.vmem [resolvable:$true] %s96
      %99 = dma.hbm_to_vmem [thread:$0]  %s95, 96, %s97, [#allocation12]
    $region29: #{tpu_custom_call.1} parent=1 // pred_fallthru
      _
    // Predicated region
    $region30: #{tpu_custom_call.1} parent=1 // pred_check
      _
    $region31: #{tpu_custom_call.1} parent=1 // pred_check_branch
      %101 = sbr.rel (0) target = $region33
    $region32: #{tpu_custom_call.1} parent=1 // pred_region
      %103 = dma.done [#allocation3], 64
    $region33: #{tpu_custom_call.1} parent=1 // pred_fallthru
      _
    // Predicated region
    $region34: #{tpu_custom_call.1} parent=1 // pred_check
      _
    $region35: #{tpu_custom_call.1} parent=1 // pred_check_branch
      %105 = sbr.rel (0) target = $region37
    $region36: #{tpu_custom_call.1} parent=1 // pred_region
      %107 = dma.done [#allocation6], 64
    $region37: #{tpu_custom_call.1} parent=1 // pred_fallthru
      _
    // Predicated region
    $region38: #{tpu_custom_call.1} parent=1 // pred_check
      _
    $region39: #{tpu_custom_call.1} parent=1 // pred_check_branch
      %109 = sbr.rel (0) target = $region41
    $region40: #{tpu_custom_call.1} parent=1 // pred_region
      %111 = dma.done [#allocation6], 64
    $region41: #{tpu_custom_call.1} parent=1 // pred_fallthru
      _
    // Predicated region
    $region42: #{tpu_custom_call.1} parent=1 // pred_check
      _
    $region43: #{tpu_custom_call.1} parent=1 // pred_check_branch
      %113 = sbr.rel (0) target = $region45
    $region44: #{tpu_custom_call.1} parent=1 // pred_region
      %115 = dma.done [#allocation9], 1536
    $region45: #{tpu_custom_call.1} parent=1 // pred_fallthru
      _
    // Predicated region
    $region46: #{tpu_custom_call.1} parent=1 // pred_check
      _
    $region47: #{tpu_custom_call.1} parent=1 // pred_check_branch
      %117 = sbr.rel (0) target = $region49
    $region48: #{tpu_custom_call.1} parent=1 // pred_region
      %119 = dma.done [#allocation9], 1536
    $region49: #{tpu_custom_call.1} parent=1 // pred_fallthru
      _
    // Predicated region
    $region50: #{tpu_custom_call.1} parent=1 // pred_check
      _
    $region51: #{tpu_custom_call.1} parent=1 // pred_check_branch
      %121 = sbr.rel (0) target = $region53
    $region52: #{tpu_custom_call.1} parent=1 // pred_region
      %123 = dma.done [#allocation12], 1536
    $region53: #{tpu_custom_call.1} parent=1 // pred_fallthru
      _
    // Predicated region
    $region54: #{tpu_custom_call.1} parent=1 // pred_check
      _
    $region55: #{tpu_custom_call.1} parent=1 // pred_check_branch
      %125 = sbr.rel (0) target = $region57
    $region56: #{tpu_custom_call.1} parent=1 // pred_region
      %127 = dma.done [#allocation12], 96
    $region57: #{tpu_custom_call.1} parent=1 // pred_fallthru
      _
    %v129 = vld [vmem:[#allocation2] sm:$0xf]
    %v130 = vld [vmem:[#allocation8] sm:$0xff]
    %v131 = vld [vmem:[#allocation8 + $0x8] sm:$0xff]
    %v132 = vld [vmem:[#allocation8 + $0x10] sm:$0xff]
    %v133 = vld [vmem:[#allocation8 + $0x18] sm:$0xff]
    %v134 = vld [vmem:[#allocation8 + $0x20] sm:$0xff]
    %v135 = vld [vmem:[#allocation8 + $0x28] sm:$0xff]
    %v136 = vld [vmem:[#allocation8 + $0x30] sm:$0xff]
    %v137 = vld [vmem:[#allocation8 + $0x38] sm:$0xff]
    %v138 = vld [vmem:[#allocation8 + $0x40] sm:$0xff]
    %v139 = vld [vmem:[#allocation8 + $0x48] sm:$0xff]
    %v140 = vld [vmem:[#allocation8 + $0x50] sm:$0xff]
    %v141 = vld [vmem:[#allocation8 + $0x58] sm:$0xff]
    %v142 = vld [vmem:[#allocation5] sm:$0xf]
    %v143 = vld [vmem:[#allocation10] sm:$0xff]
    %v144 = vld [vmem:[#allocation10 + $0x8] sm:$0xff]
    %v145 = vld [vmem:[#allocation10 + $0x10] sm:$0xff]
    %v146 = vld [vmem:[#allocation10 + $0x18] sm:$0xff]
    %v147 = vld [vmem:[#allocation10 + $0x20] sm:$0xff]
    %v148 = vld [vmem:[#allocation10 + $0x28] sm:$0xff]
    %v149 = vld [vmem:[#allocation10 + $0x30] sm:$0xff]
    %v150 = vld [vmem:[#allocation10 + $0x38] sm:$0xff]
    %v151 = vld [vmem:[#allocation10 + $0x40] sm:$0xff]
    %v152 = vld [vmem:[#allocation10 + $0x48] sm:$0xff]
    %v153 = vld [vmem:[#allocation10 + $0x50] sm:$0xff]
    %v154 = vld [vmem:[#allocation10 + $0x58] sm:$0xff]
    %v167 = vunpack.c.l.b16 %v143
    %v168 = vunpack.c.h.b16 %v143
    %v169 = vunpack.c.l.b16 %v144
    %v170 = vunpack.c.h.b16 %v144
    %v171 = vunpack.c.l.b16 %v145
    %v172 = vunpack.c.h.b16 %v145
    %v173 = vunpack.c.l.b16 %v146
    %v174 = vunpack.c.h.b16 %v146
    %v175 = vunpack.c.l.b16 %v147
    %v176 = vunpack.c.h.b16 %v147
    %v177 = vunpack.c.l.b16 %v148
    %v178 = vunpack.c.h.b16 %v148
    %v179 = vunpack.c.l.b16 %v149
    %v180 = vunpack.c.h.b16 %v149
    %v181 = vunpack.c.l.b16 %v150
    %v182 = vunpack.c.h.b16 %v150
    %v183 = vunpack.c.l.b16 %v151
    %v184 = vunpack.c.h.b16 %v151
    %v185 = vunpack.c.l.b16 %v152
    %v186 = vunpack.c.h.b16 %v152
    %v187 = vunpack.c.l.b16 %v153
    %v188 = vunpack.c.h.b16 %v153
    %v189 = vunpack.c.l.b16 %v154
    %v190 = vunpack.c.h.b16 %v154
    %v191 = vpack.c.b16 %v173, %v167
    %v192 = vpack.c.b16 %v174, %v168
    %v193 = vpack.c.b16 %v175, %v169
    %v194 = vpack.c.b16 %v176, %v170
    %v195 = vpack.c.b16 %v177, %v171
    %v196 = vpack.c.b16 %v178, %v172
    %v197 = vpack.c.b16 %v185, %v179
    %v198 = vpack.c.b16 %v186, %v180
    %v199 = vpack.c.b16 %v187, %v181
    %v200 = vpack.c.b16 %v188, %v182
    %v201 = vpack.c.b16 %v189, %v183
    %v202 = vpack.c.b16 %v190, %v184
    %vm215 = vcmask 261120
    %v217 = vsel %vm215, %v142, 0
    %219 = vmatpush.bf16.msra.mxu0 0
    %220 = vmatpush.bf16.msra.mxu0 0
    %221 = vmatpush.bf16.msra.mxu0 0
    %222 = vmatpush.bf16.msra.mxu0 0
    %223 = vmatpush.bf16.msra.mxu0 0
    %224 = vmatpush.bf16.msra.mxu0 0
    %225 = vmatpush.bf16.msra.mxu0 %v197
    %226 = vmatpush.bf16.msra.mxu0 %v191
    %227 = vmatmul.bf16.gmra.mxu0 %v217
    %v228 = vpop.f32.mrf.mxu0
    %v229 = vadd.f32 0.0, %v228
    %v230 = vpop.f32.mrf.mxu0
    %231 = vdwg.mxu0
    %232 = vmatpush.bf16.msra.mxu0 0
    %233 = vmatpush.bf16.msra.mxu0 0
    %234 = vmatpush.bf16.msra.mxu0 0
    %235 = vmatpush.bf16.msra.mxu0 0
    %236 = vmatpush.bf16.msra.mxu0 0
    %237 = vmatpush.bf16.msra.mxu0 0
    %238 = vmatpush.bf16.msra.mxu0 %v198
    %239 = vmatpush.bf16.msra.mxu0 %v192
    %240 = vmatmul.bf16.gmra.mxu0 %v217
    %v241 = vpop.f32.mrf.mxu0
    %v242 = vadd.f32 0.0, %v241
    %v243 = vpop.f32.mrf.mxu0
    %244 = vdwg.mxu0
    %245 = vmatpush.bf16.msra.mxu0 0
    %246 = vmatpush.bf16.msra.mxu0 0
    %247 = vmatpush.bf16.msra.mxu0 0
    %248 = vmatpush.bf16.msra.mxu0 0
    %249 = vmatpush.bf16.msra.mxu0 0
    %250 = vmatpush.bf16.msra.mxu0 0
    %251 = vmatpush.bf16.msra.mxu0 %v199
    %252 = vmatpush.bf16.msra.mxu0 %v193
    %253 = vmatmul.bf16.gmra.mxu0 %v217
    %v254 = vpop.f32.mrf.mxu0
    %v255 = vadd.f32 0.0, %v254
    %v256 = vpop.f32.mrf.mxu0
    %257 = vdwg.mxu0
    %258 = vmatpush.bf16.msra.mxu0 0
    %259 = vmatpush.bf16.msra.mxu0 0
    %260 = vmatpush.bf16.msra.mxu0 0
    %261 = vmatpush.bf16.msra.mxu0 0
    %262 = vmatpush.bf16.msra.mxu0 0
    %263 = vmatpush.bf16.msra.mxu0 0
    %264 = vmatpush.bf16.msra.mxu0 %v200
    %265 = vmatpush.bf16.msra.mxu0 %v194
    %266 = vmatmul.bf16.gmra.mxu0 %v217
    %v267 = vpop.f32.mrf.mxu0
    %v268 = vadd.f32 0.0, %v267
    %v269 = vpop.f32.mrf.mxu0
    %270 = vdwg.mxu0
    %271 = vmatpush.bf16.msra.mxu0 0
    %272 = vmatpush.bf16.msra.mxu0 0
    %273 = vmatpush.bf16.msra.mxu0 0
    %274 = vmatpush.bf16.msra.mxu0 0
    %275 = vmatpush.bf16.msra.mxu0 0
    %276 = vmatpush.bf16.msra.mxu0 0
    %277 = vmatpush.bf16.msra.mxu0 %v201
    %278 = vmatpush.bf16.msra.mxu0 %v195
    %279 = vmatmul.bf16.gmra.mxu0 %v217
    %v280 = vpop.f32.mrf.mxu0
    %v281 = vadd.f32 0.0, %v280
    %v282 = vpop.f32.mrf.mxu0
    %283 = vdwg.mxu0
    %284 = vmatpush.bf16.msra.mxu0 0
    %285 = vmatpush.bf16.msra.mxu0 0
    %286 = vmatpush.bf16.msra.mxu0 0
    %287 = vmatpush.bf16.msra.mxu0 0
    %288 = vmatpush.bf16.msra.mxu0 0
    %289 = vmatpush.bf16.msra.mxu0 0
    %290 = vmatpush.bf16.msra.mxu0 %v202
    %291 = vmatpush.bf16.msra.mxu0 %v196
    %292 = vmatmul.bf16.gmra.mxu0 %v217
    %v293 = vpop.f32.mrf.mxu0
    %v294 = vadd.f32 0.0, %v293
    %v295 = vpop.f32.mrf.mxu0
    %296 = vdwg.mxu0
    %v309 = vunpack.c.l.b16 %v130
    %v310 = vunpack.c.h.b16 %v130
    %v311 = vunpack.c.l.b16 %v131
    %v312 = vunpack.c.h.b16 %v131
    %v313 = vunpack.c.l.b16 %v132
    %v314 = vunpack.c.h.b16 %v132
    %v315 = vunpack.c.l.b16 %v133
    %v316 = vunpack.c.h.b16 %v133
    %v317 = vunpack.c.l.b16 %v134
    %v318 = vunpack.c.h.b16 %v134
    %v319 = vunpack.c.l.b16 %v135
    %v320 = vunpack.c.h.b16 %v135
    %v321 = vunpack.c.l.b16 %v136
    %v322 = vunpack.c.h.b16 %v136
    %v323 = vunpack.c.l.b16 %v137
    %v324 = vunpack.c.h.b16 %v137
    %v325 = vunpack.c.l.b16 %v138
    %v326 = vunpack.c.h.b16 %v138
    %v327 = vunpack.c.l.b16 %v139
    %v328 = vunpack.c.h.b16 %v139
    %v329 = vunpack.c.l.b16 %v140
    %v330 = vunpack.c.h.b16 %v140
    %v331 = vunpack.c.l.b16 %v141
    %v332 = vunpack.c.h.b16 %v141
    %v333 = vpack.c.b16 %v315, %v309
    %v334 = vpack.c.b16 %v316, %v310
    %v335 = vpack.c.b16 %v317, %v311
    %v336 = vpack.c.b16 %v318, %v312
    %v337 = vpack.c.b16 %v319, %v313
    %v338 = vpack.c.b16 %v320, %v314
    %v339 = vpack.c.b16 %v327, %v321
    %v340 = vpack.c.b16 %v328, %v322
    %v341 = vpack.c.b16 %v329, %v323
    %v342 = vpack.c.b16 %v330, %v324
    %v343 = vpack.c.b16 %v331, %v325
    %v344 = vpack.c.b16 %v332, %v326
    %v358 = vsel %vm215, %v129, 0
    %360 = vmatpush.bf16.msra.mxu0 0
    %361 = vmatpush.bf16.msra.mxu0 0
    %362 = vmatpush.bf16.msra.mxu0 0
    %363 = vmatpush.bf16.msra.mxu0 0
    %364 = vmatpush.bf16.msra.mxu0 0
    %365 = vmatpush.bf16.msra.mxu0 0
    %366 = vmatpush.bf16.msra.mxu0 %v339
    %367 = vmatpush.bf16.msra.mxu0 %v333
    %368 = vmatmul.bf16.gmra.mxu0 %v358
    %v369 = vpop.f32.mrf.mxu0
    %v370 = vadd.f32 %v229, %v369
    %v371 = vpop.f32.mrf.mxu0
    %372 = vdwg.mxu0
    %373 = vmatpush.bf16.msra.mxu0 0
    %374 = vmatpush.bf16.msra.mxu0 0
    %375 = vmatpush.bf16.msra.mxu0 0
    %376 = vmatpush.bf16.msra.mxu0 0
    %377 = vmatpush.bf16.msra.mxu0 0
    %378 = vmatpush.bf16.msra.mxu0 0
    %379 = vmatpush.bf16.msra.mxu0 %v340
    %380 = vmatpush.bf16.msra.mxu0 %v334
    %381 = vmatmul.bf16.gmra.mxu0 %v358
    %v382 = vpop.f32.mrf.mxu0
    %v383 = vadd.f32 %v242, %v382
    %v384 = vpop.f32.mrf.mxu0
    %385 = vdwg.mxu0
    %386 = vmatpush.bf16.msra.mxu0 0
    %387 = vmatpush.bf16.msra.mxu0 0
    %388 = vmatpush.bf16.msra.mxu0 0
    %389 = vmatpush.bf16.msra.mxu0 0
    %390 = vmatpush.bf16.msra.mxu0 0
    %391 = vmatpush.bf16.msra.mxu0 0
    %392 = vmatpush.bf16.msra.mxu0 %v341
    %393 = vmatpush.bf16.msra.mxu0 %v335
    %394 = vmatmul.bf16.gmra.mxu0 %v358
    %v395 = vpop.f32.mrf.mxu0
    %v396 = vadd.f32 %v255, %v395
    %v397 = vpop.f32.mrf.mxu0
    %398 = vdwg.mxu0
    %399 = vmatpush.bf16.msra.mxu0 0
    %400 = vmatpush.bf16.msra.mxu0 0
    %401 = vmatpush.bf16.msra.mxu0 0
    %402 = vmatpush.bf16.msra.mxu0 0
    %403 = vmatpush.bf16.msra.mxu0 0
    %404 = vmatpush.bf16.msra.mxu0 0
    %405 = vmatpush.bf16.msra.mxu0 %v342
    %406 = vmatpush.bf16.msra.mxu0 %v336
    %407 = vmatmul.bf16.gmra.mxu0 %v358
    %v408 = vpop.f32.mrf.mxu0
    %v409 = vadd.f32 %v268, %v408
    %v410 = vpop.f32.mrf.mxu0
    %411 = vdwg.mxu0
    %412 = vmatpush.bf16.msra.mxu0 0
    %413 = vmatpush.bf16.msra.mxu0 0
    %414 = vmatpush.bf16.msra.mxu0 0
    %415 = vmatpush.bf16.msra.mxu0 0
    %416 = vmatpush.bf16.msra.mxu0 0
    %417 = vmatpush.bf16.msra.mxu0 0
    %418 = vmatpush.bf16.msra.mxu0 %v343
    %419 = vmatpush.bf16.msra.mxu0 %v337
    %420 = vmatmul.bf16.gmra.mxu0 %v358
    %v421 = vpop.f32.mrf.mxu0
    %v422 = vadd.f32 %v281, %v421
    %v423 = vpop.f32.mrf.mxu0
    %424 = vdwg.mxu0
    %425 = vmatpush.bf16.msra.mxu0 0
    %426 = vmatpush.bf16.msra.mxu0 0
    %427 = vmatpush.bf16.msra.mxu0 0
    %428 = vmatpush.bf16.msra.mxu0 0
    %429 = vmatpush.bf16.msra.mxu0 0
    %430 = vmatpush.bf16.msra.mxu0 0
    %431 = vmatpush.bf16.msra.mxu0 %v344
    %432 = vmatpush.bf16.msra.mxu0 %v338
    %433 = vmatmul.bf16.gmra.mxu0 %v358
    %v434 = vpop.f32.mrf.mxu0
    %v435 = vadd.f32 %v294, %v434
    %v436 = vpop.f32.mrf.mxu0
    %437 = vdwg.mxu0
    %v438 = vld [vmem:[#allocation7] sm:$0xf]
    %v439 = vld [vmem:[#allocation11] sm:$0xff]
    %v440 = vld [vmem:[#allocation11 + $0x8] sm:$0xff]
    %v441 = vld [vmem:[#allocation11 + $0x10] sm:$0xff]
    %v442 = vld [vmem:[#allocation11 + $0x18] sm:$0xff]
    %v443 = vld [vmem:[#allocation11 + $0x20] sm:$0xff]
    %v444 = vld [vmem:[#allocation11 + $0x28] sm:$0xff]
    %v445 = vld [vmem:[#allocation11 + $0x30] sm:$0xff]
    %v446 = vld [vmem:[#allocation11 + $0x38] sm:$0xff]
    %v447 = vld [vmem:[#allocation11 + $0x40] sm:$0xff]
    %v448 = vld [vmem:[#allocation11 + $0x48] sm:$0xff]
    %v449 = vld [vmem:[#allocation11 + $0x50] sm:$0xff]
    %v450 = vld [vmem:[#allocation11 + $0x58] sm:$0xff]
    %v463 = vunpack.c.l.b16 %v439
    %v464 = vunpack.c.h.b16 %v439
    %v465 = vunpack.c.l.b16 %v440
    %v466 = vunpack.c.h.b16 %v440
    %v467 = vunpack.c.l.b16 %v441
    %v468 = vunpack.c.h.b16 %v441
    %v469 = vunpack.c.l.b16 %v442
    %v470 = vunpack.c.h.b16 %v442
    %v471 = vunpack.c.l.b16 %v443
    %v472 = vunpack.c.h.b16 %v443
    %v473 = vunpack.c.l.b16 %v444
    %v474 = vunpack.c.h.b16 %v444
    %v475 = vunpack.c.l.b16 %v445
    %v476 = vunpack.c.h.b16 %v445
    %v477 = vunpack.c.l.b16 %v446
    %v478 = vunpack.c.h.b16 %v446
    %v479 = vunpack.c.l.b16 %v447
    %v480 = vunpack.c.h.b16 %v447
    %v481 = vunpack.c.l.b16 %v448
    %v482 = vunpack.c.h.b16 %v448
    %v483 = vunpack.c.l.b16 %v449
    %v484 = vunpack.c.h.b16 %v449
    %v485 = vunpack.c.l.b16 %v450
    %v486 = vunpack.c.h.b16 %v450
    %v487 = vpack.c.b16 %v469, %v463
    %v488 = vpack.c.b16 %v470, %v464
    %v489 = vpack.c.b16 %v471, %v465
    %v490 = vpack.c.b16 %v472, %v466
    %v491 = vpack.c.b16 %v473, %v467
    %v492 = vpack.c.b16 %v474, %v468
    %v493 = vpack.c.b16 %v481, %v475
    %v494 = vpack.c.b16 %v482, %v476
    %v495 = vpack.c.b16 %v483, %v477
    %v496 = vpack.c.b16 %v484, %v478
    %v497 = vpack.c.b16 %v485, %v479
    %v498 = vpack.c.b16 %v486, %v480
    %v512 = vsel %vm215, %v438, 0
    %514 = vmatpush.bf16.msra.mxu0 0
    %515 = vmatpush.bf16.msra.mxu0 0
    %516 = vmatpush.bf16.msra.mxu0 0
    %517 = vmatpush.bf16.msra.mxu0 0
    %518 = vmatpush.bf16.msra.mxu0 0
    %519 = vmatpush.bf16.msra.mxu0 0
    %520 = vmatpush.bf16.msra.mxu0 %v493
    %521 = vmatpush.bf16.msra.mxu0 %v487
    %522 = vmatmul.bf16.gmra.mxu0 %v512
    %v523 = vpop.f32.mrf.mxu0
    %v524 = vadd.f32 0.0, %v523
    %v525 = vpop.f32.mrf.mxu0
    %526 = vdwg.mxu0
    %527 = vmatpush.bf16.msra.mxu0 0
    %528 = vmatpush.bf16.msra.mxu0 0
    %529 = vmatpush.bf16.msra.mxu0 0
    %530 = vmatpush.bf16.msra.mxu0 0
    %531 = vmatpush.bf16.msra.mxu0 0
    %532 = vmatpush.bf16.msra.mxu0 0
    %533 = vmatpush.bf16.msra.mxu0 %v494
    %534 = vmatpush.bf16.msra.mxu0 %v488
    %535 = vmatmul.bf16.gmra.mxu0 %v512
    %v536 = vpop.f32.mrf.mxu0
    %v537 = vadd.f32 0.0, %v536
    %v538 = vpop.f32.mrf.mxu0
    %539 = vdwg.mxu0
    %540 = vmatpush.bf16.msra.mxu0 0
    %541 = vmatpush.bf16.msra.mxu0 0
    %542 = vmatpush.bf16.msra.mxu0 0
    %543 = vmatpush.bf16.msra.mxu0 0
    %544 = vmatpush.bf16.msra.mxu0 0
    %545 = vmatpush.bf16.msra.mxu0 0
    %546 = vmatpush.bf16.msra.mxu0 %v495
    %547 = vmatpush.bf16.msra.mxu0 %v489
    %548 = vmatmul.bf16.gmra.mxu0 %v512
    %v549 = vpop.f32.mrf.mxu0
    %v550 = vadd.f32 0.0, %v549
    %v551 = vpop.f32.mrf.mxu0
    %552 = vdwg.mxu0
    %553 = vmatpush.bf16.msra.mxu0 0
    %554 = vmatpush.bf16.msra.mxu0 0
    %555 = vmatpush.bf16.msra.mxu0 0
    %556 = vmatpush.bf16.msra.mxu0 0
    %557 = vmatpush.bf16.msra.mxu0 0
    %558 = vmatpush.bf16.msra.mxu0 0
    %559 = vmatpush.bf16.msra.mxu0 %v496
    %560 = vmatpush.bf16.msra.mxu0 %v490
    %561 = vmatmul.bf16.gmra.mxu0 %v512
    %v562 = vpop.f32.mrf.mxu0
    %v563 = vadd.f32 0.0, %v562
    %v564 = vpop.f32.mrf.mxu0
    %565 = vdwg.mxu0
    %566 = vmatpush.bf16.msra.mxu0 0
    %567 = vmatpush.bf16.msra.mxu0 0
    %568 = vmatpush.bf16.msra.mxu0 0
    %569 = vmatpush.bf16.msra.mxu0 0
    %570 = vmatpush.bf16.msra.mxu0 0
    %571 = vmatpush.bf16.msra.mxu0 0
    %572 = vmatpush.bf16.msra.mxu0 %v497
    %573 = vmatpush.bf16.msra.mxu0 %v491
    %574 = vmatmul.bf16.gmra.mxu0 %v512
    %v575 = vpop.f32.mrf.mxu0
    %v576 = vadd.f32 0.0, %v575
    %v577 = vpop.f32.mrf.mxu0
    %578 = vdwg.mxu0
    %579 = vmatpush.bf16.msra.mxu0 0
    %580 = vmatpush.bf16.msra.mxu0 0
    %581 = vmatpush.bf16.msra.mxu0 0
    %582 = vmatpush.bf16.msra.mxu0 0
    %583 = vmatpush.bf16.msra.mxu0 0
    %584 = vmatpush.bf16.msra.mxu0 0
    %585 = vmatpush.bf16.msra.mxu0 %v498
    %586 = vmatpush.bf16.msra.mxu0 %v492
    %587 = vmatmul.bf16.gmra.mxu0 %v512
    %v588 = vpop.f32.mrf.mxu0
    %v589 = vadd.f32 0.0, %v588
    %v590 = vpop.f32.mrf.mxu0
    %591 = vdwg.mxu0
    %v592 = vadd.f32 %v370, %v524
    %v593 = vadd.f32 %v383, %v537
    %v594 = vadd.f32 %v396, %v550
    %v595 = vadd.f32 %v409, %v563
    %v596 = vadd.f32 %v422, %v576
    %v597 = vadd.f32 %v435, %v589
    %v598 = vld [vmem:[#allocation13] sm:$0x3f]
    %v600 = vperm.slane %v598, 0
    %v601 = vperm.slane %v598, 1
    %v602 = vperm.slane %v598, 2
    %v603 = vperm.slane %v598, 3
    %v604 = vperm.slane %v598, 4
    %v605 = vperm.slane %v598, 5
    %v612 = vadd.f32 %v592, %v600
    %v613 = vadd.f32 %v593, %v601
    %v614 = vadd.f32 %v594, %v602
    %v615 = vadd.f32 %v595, %v603
    %v616 = vadd.f32 %v596, %v604
    %v617 = vadd.f32 %v597, %v605
    %v618 = vmax.f32 %v612, 0.0
    %v619 = vmax.f32 %v613, 0.0
    %v620 = vmax.f32 %v614, 0.0
    %v621 = vmax.f32 %v615, 0.0
    %v622 = vmax.f32 %v616, 0.0
    %v623 = vmax.f32 %v617, 0.0
    %624 = vst [vmem:[#allocation14] sm:$0xff] %v618
    %625 = vst [vmem:[#allocation14 + $0x8] sm:$0xff] %v619
    %626 = vst [vmem:[#allocation14 + $0x10] sm:$0xff] %v620
    %627 = vst [vmem:[#allocation14 + $0x18] sm:$0xff] %v621
    %628 = vst [vmem:[#allocation14 + $0x20] sm:$0xff] %v622
    %629 = vst [vmem:[#allocation14 + $0x28] sm:$0xff] %v623
    // Predicated region
    $region58: #{tpu_custom_call.1} parent=1 // pred_check
      _
    $region59: #{tpu_custom_call.1} parent=1 // pred_check_branch
      %631 = sbr.rel (0) target = $region61
    $region60: #{tpu_custom_call.1} parent=1 // pred_region
      %633 = vsyncadd [#allocation4], 0
      %s635 = sshll.u32 [#allocation14], 4
      %s636 = int_to_ptr.vmem [resolvable:$true] %s635
      %s637 = sshll.u32 %s7, 4
      %s638 = int_to_ptr.hbm [resolvable:$true] %s637
      %640 = dma.vmem_to_hbm [thread:$0]  %s636, 768, %s638, [#allocation4]
    $region61: #{tpu_custom_call.1} parent=1 // pred_fallthru
      _
    // Predicated region
    $region62: #{tpu_custom_call.1} parent=1 // pred_check
      _
    $region63: #{tpu_custom_call.1} parent=1 // pred_check_branch
      %642 = sbr.rel (0) target = $region65
    $region64: #{tpu_custom_call.1} parent=1 // pred_region
      %644 = dma.done [#allocation4], 768
    $region65: #{tpu_custom_call.1} parent=1 // pred_fallthru
      _
    %645 = vsyncpa [#allocation3], 1
    %646 = vsyncpa [#allocation6], 1
    %647 = vsyncpa [#allocation9], 1
    %648 = vsyncpa [#allocation12], 1
    %649 = vsyncpa [#allocation4], 1

</llo_original>
